<compile_context>
chip_gen: v6e
topology: v6e:2x2x1
jax: 0.10.0
libtpu: 0.0.40
codegen_flags: <defaults>
</compile_context>

<pallas_src>
import functools

import jax
import jax.numpy as jnp
from jax.experimental import pallas as pl
from jax.experimental.pallas import tpu as pltpu


def dscb_kernel(x_ref, mask_ref, dw_ref, pw_ref, pb_ref, out_ref, *, W):
    # x_ref:    (1, C, H*W)    one batch element (C on sublanes, H*W on lanes)
    # mask_ref: (9, H*W)       per-tap border masks (1.0 inside the image,
    #                          0.0 where the 3x3 window would read padding)
    # dw_ref:   (C, 9)         depthwise weights, tap index on lanes
    # pw_ref:   (Cout, C)      pointwise weights
    # pb_ref:   (Cout, 1)      pointwise bias
    # out_ref:  (1, Cout, H*W)
    C = x_ref.shape[1]
    HW = x_ref.shape[2]
    Cout = out_ref.shape[1]

    x = x_ref[0]                                   # (C, HW); no extra cast/copy
    dwv = dw_ref[...].astype(jnp.float32)          # (C, 9)
    masks = mask_ref[...]                          # (9, HW) float32 {0, 1}

    # Depthwise 3x3, stride 1: 9 lane-rolled taps, masked at the border,
    # accumulated in f32.  Wanted: out[p] = x[p + dh*W + dw]  =>  roll shift
    # is -(dh*W + dw) mod HW (jnp.roll semantics).
    acc = jnp.zeros((C, HW), jnp.float32)
    for kh in range(3):
        for kw in range(3):
            k = kh * 3 + kw
            d = (kh - 1) * W + (kw - 1)
            tap = x if d == 0 else pltpu.roll(x, shift=(-d) % HW, axis=1)
            if d != 0:
                tap = tap * masks[k:k + 1, :]       # zero out-of-image reads
            acc = acc + tap * dwv[:, k:k + 1]       # per-channel scalar weight

    # Pointwise 1x1 conv: y[o, p] = sum_c pw[o, c] * acc[c, p] + pb[o].
    pw = pw_ref[...].astype(jnp.float32)            # (Cout, C)
    if C <= 32:
        # Tiny contraction: keep it on the VPU as C broadcast FMAs.
        y = jnp.zeros((Cout, HW), jnp.float32)
        for c in range(C):
            y = y + pw[:, c:c + 1] * acc[c:c + 1, :]
    else:
        # Large C: feed the MXU with a lane-dense (C, HW) operand.
        y = jnp.dot(pw, acc, preferred_element_type=jnp.float32)
    y = y + pb_ref[...].astype(jnp.float32)          # (Cout, 1) lane-broadcast
    out_ref[0] = y.astype(out_ref.dtype)


@jax.jit
def dscb_forward(x_nchw, dw_oihw, pw_oihw, pb):
    """x_nchw: (N,C,H,W); dw_oihw: (C,1,3,3); pw_oihw: (Cout,C,1,1); pb: (Cout,)."""
    N, C, H, W = x_nchw.shape
    Cout = pw_oihw.shape[0]
    HW = H * W

    # Metadata-only reshapes (no transpose, no pad -> no extra HBM passes
    # over the activation tensor).
    x3 = x_nchw.reshape(N, C, HW)
    dw_c9 = dw_oihw.reshape(C, 9)
    pw2 = pw_oihw.reshape(Cout, C)
    pb2 = pb.reshape(Cout, 1)

    # Per-tap validity masks implementing the CSP "same" padding (pad=1 each
    # side for k=3, s=1) inside the kernel.  Tiny (9, H*W) constant.
    rows = jnp.arange(H)
    cols = jnp.arange(W)
    masks = []
    for kh in range(3):
        row_ok = (rows + (kh - 1) >= 0) & (rows + (kh - 1) < H)
        for kw in range(3):
            col_ok = (cols + (kw - 1) >= 0) & (cols + (kw - 1) < W)
            masks.append((row_ok[:, None] & col_ok[None, :]).reshape(HW))
    tap_mask = jnp.stack(masks).astype(jnp.float32)          # (9, HW)

    # Grid over batch only: at these shapes a whole image per step is a few
    # KiB of VMEM.  For production-size images (esp. v7x: 64 MiB VMEM and
    # 2 TensorCores) add a second "parallel" grid axis over row tiles of H
    # (the lane axis stays the row-flattened spatial dim).
    out3 = pl.pallas_call(
        functools.partial(dscb_kernel, W=W),
        out_shape=jax.ShapeDtypeStruct((N, Cout, HW), x_nchw.dtype),
        grid=(N,),
        in_specs=[
            pl.BlockSpec((1, C, HW), lambda n: (n, 0, 0)),
            pl.BlockSpec((9, HW), lambda n: (0, 0)),
            pl.BlockSpec((C, 9), lambda n: (0, 0)),
            pl.BlockSpec((Cout, C), lambda n: (0, 0)),
            pl.BlockSpec((Cout, 1), lambda n: (0, 0)),
        ],
        out_specs=pl.BlockSpec((1, Cout, HW), lambda n: (n, 0, 0)),
        compiler_params=pltpu.CompilerParams(
            dimension_semantics=("parallel",)),
    )(x3, tap_mask, dw_c9, pw2, pb2)

    return out3.reshape(N, Cout, H, W)


def ref_forward(x, dw, pw, pb):
    """Pure-JAX reference using lax.conv (NCHW / OIHW, like PyTorch)."""
    y = jax.lax.conv_general_dilated(
        x, dw, window_strides=(1, 1), padding=((1, 1), (1, 1)),
        dimension_numbers=("NCHW", "OIHW", "NCHW"),
        feature_group_count=x.shape[1])
    z = jax.lax.conv_general_dilated(
        y, pw, window_strides=(1, 1), padding=((0, 0), (0, 0)),
        dimension_numbers=("NCHW", "OIHW", "NCHW"))
    return z + pb[None, :, None, None]


if __name__ == "__main__":
    N, C, H, W = 2, 4, 16, 16
    Cout = 8

    key = jax.random.PRNGKey(0)
    kx, kdw, kpw, kpb = jax.random.split(key, 4)

    x = jax.random.normal(kx, (N, C, H, W), jnp.float32)
    # Shapes match the nn.Conv2d weights in DSCB_:
    # depthwise: (C, 1, 3, 3), no bias; pointwise: (Cout, C, 1, 1) + bias (Cout,)
    dw = jax.random.normal(kdw, (C, 1, 3, 3), jnp.float32) * (1.0 / 3.0)
    pw = jax.random.normal(kpw, (Cout, C, 1, 1), jnp.float32) * (1.0 / C ** 0.5)
    pb = jax.random.normal(kpb, (Cout,), jnp.float32) * 0.1

    out = dscb_forward(x, dw, pw, pb)
    out = jax.block_until_ready(out)

    ref = ref_forward(x, dw, pw, pb)
    assert out.shape == (N, Cout, H, W)
    assert jnp.allclose(out, ref, atol=1e-4, rtol=1e-4), \
        f"max err {jnp.max(jnp.abs(out - ref))}"

    print("KERNEL_OK")
</pallas_src>

<mosaic_0001>
module attributes {stable_mosaic.version = 11 : i64} {
  func.func @dscb_kernel(%arg0: i32, %arg1: memref<1x4x256xf32, #tpu.memory_space<vmem>>, %arg2: memref<9x256xf32, #tpu.memory_space<vmem>>, %arg3: memref<4x9xf32, #tpu.memory_space<vmem>>, %arg4: memref<8x4xf32, #tpu.memory_space<vmem>>, %arg5: memref<8x1xf32, #tpu.memory_space<vmem>>, %arg6: memref<1x8x256xf32, #tpu.memory_space<vmem>>) attributes {dimension_semantics = [#tpu.dimension_semantics<parallel>], iteration_bounds = array<i64: 2>, scalar_prefetch = 0 : i64, scratch_operands = 0 : i64, tpu.core_type = #tpu.core_type<tc>, window_params = [{transform_indices = @transform_0, window_bounds = array<i64: 1, 4, 256>}, {pipeline_mode = #tpu.pipeline_mode<synchronous>, transform_indices = @transform_1, window_bounds = array<i64: 9, 256>}, {pipeline_mode = #tpu.pipeline_mode<synchronous>, transform_indices = @transform_2, window_bounds = array<i64: 4, 9>}, {pipeline_mode = #tpu.pipeline_mode<synchronous>, transform_indices = @transform_3, window_bounds = array<i64: 8, 4>}, {pipeline_mode = #tpu.pipeline_mode<synchronous>, transform_indices = @transform_4, window_bounds = array<i64: 8, 1>}, {transform_indices = @transform_5, window_bounds = array<i64: 1, 8, 256>}]} {
    %c0 = arith.constant 0 : index
    %c0_0 = arith.constant 0 : index
    %c0_1 = arith.constant 0 : index
    %0 = vector.load %arg1[%c0, %c0_0, %c0_1] : memref<1x4x256xf32, #tpu.memory_space<vmem>>, vector<1x4x256xf32>
    %1 = vector.shape_cast %0 : vector<1x4x256xf32> to vector<4x256xf32>
    %c0_2 = arith.constant 0 : index
    %c0_3 = arith.constant 0 : index
    %2 = vector.load %arg3[%c0_2, %c0_3] : memref<4x9xf32, #tpu.memory_space<vmem>>, vector<4x9xf32>
    %c0_4 = arith.constant 0 : index
    %c0_5 = arith.constant 0 : index
    %3 = vector.load %arg2[%c0_4, %c0_5] : memref<9x256xf32, #tpu.memory_space<vmem>>, vector<9x256xf32>
    %cst = arith.constant 0.000000e+00 : f32
    %4 = vector.broadcast %cst : f32 to vector<4x256xf32>
    %c17_i32 = arith.constant 17 : i32
    %5 = tpu.dynamic_rotate %1 by %c17_i32 dim 1 : vector<4x256xf32>, i32 -> vector<4x256xf32>
    %6 = vector.extract_strided_slice %3 {offsets = [0, 0], sizes = [1, 256], strides = [1, 1]} : vector<9x256xf32> to vector<1x256xf32>
    %7 = vector.broadcast %6 : vector<1x256xf32> to vector<4x256xf32>
    %8 = arith.mulf %5, %7 : vector<4x256xf32>
    %9 = vector.extract_strided_slice %2 {offsets = [0, 0], sizes = [4, 1], strides = [1, 1]} : vector<4x9xf32> to vector<4x1xf32>
    %10 = vector.broadcast %9 : vector<4x1xf32> to vector<4x256xf32>
    %11 = arith.mulf %8, %10 : vector<4x256xf32>
    %12 = arith.addf %4, %11 : vector<4x256xf32>
    %c16_i32 = arith.constant 16 : i32
    %13 = tpu.dynamic_rotate %1 by %c16_i32 dim 1 : vector<4x256xf32>, i32 -> vector<4x256xf32>
    %14 = vector.extract_strided_slice %3 {offsets = [1, 0], sizes = [1, 256], strides = [1, 1]} : vector<9x256xf32> to vector<1x256xf32>
    %15 = vector.broadcast %14 : vector<1x256xf32> to vector<4x256xf32>
    %16 = arith.mulf %13, %15 : vector<4x256xf32>
    %17 = vector.extract_strided_slice %2 {offsets = [0, 1], sizes = [4, 1], strides = [1, 1]} : vector<4x9xf32> to vector<4x1xf32>
    %18 = vector.broadcast %17 : vector<4x1xf32> to vector<4x256xf32>
    %19 = arith.mulf %16, %18 : vector<4x256xf32>
    %20 = arith.addf %12, %19 : vector<4x256xf32>
    %c15_i32 = arith.constant 15 : i32
    %21 = tpu.dynamic_rotate %1 by %c15_i32 dim 1 : vector<4x256xf32>, i32 -> vector<4x256xf32>
    %22 = vector.extract_strided_slice %3 {offsets = [2, 0], sizes = [1, 256], strides = [1, 1]} : vector<9x256xf32> to vector<1x256xf32>
    %23 = vector.broadcast %22 : vector<1x256xf32> to vector<4x256xf32>
    %24 = arith.mulf %21, %23 : vector<4x256xf32>
    %25 = vector.extract_strided_slice %2 {offsets = [0, 2], sizes = [4, 1], strides = [1, 1]} : vector<4x9xf32> to vector<4x1xf32>
    %26 = vector.broadcast %25 : vector<4x1xf32> to vector<4x256xf32>
    %27 = arith.mulf %24, %26 : vector<4x256xf32>
    %28 = arith.addf %20, %27 : vector<4x256xf32>
    %c1_i32 = arith.constant 1 : i32
    %29 = tpu.dynamic_rotate %1 by %c1_i32 dim 1 : vector<4x256xf32>, i32 -> vector<4x256xf32>
    %30 = vector.extract_strided_slice %3 {offsets = [3, 0], sizes = [1, 256], strides = [1, 1]} : vector<9x256xf32> to vector<1x256xf32>
    %31 = vector.broadcast %30 : vector<1x256xf32> to vector<4x256xf32>
    %32 = arith.mulf %29, %31 : vector<4x256xf32>
    %33 = vector.extract_strided_slice %2 {offsets = [0, 3], sizes = [4, 1], strides = [1, 1]} : vector<4x9xf32> to vector<4x1xf32>
    %34 = vector.broadcast %33 : vector<4x1xf32> to vector<4x256xf32>
    %35 = arith.mulf %32, %34 : vector<4x256xf32>
    %36 = arith.addf %28, %35 : vector<4x256xf32>
    %37 = vector.extract_strided_slice %2 {offsets = [0, 4], sizes = [4, 1], strides = [1, 1]} : vector<4x9xf32> to vector<4x1xf32>
    %38 = vector.broadcast %37 : vector<4x1xf32> to vector<4x256xf32>
    %39 = arith.mulf %1, %38 : vector<4x256xf32>
    %40 = arith.addf %36, %39 : vector<4x256xf32>
    %c255_i32 = arith.constant 255 : i32
    %41 = tpu.dynamic_rotate %1 by %c255_i32 dim 1 : vector<4x256xf32>, i32 -> vector<4x256xf32>
    %42 = vector.extract_strided_slice %3 {offsets = [5, 0], sizes = [1, 256], strides = [1, 1]} : vector<9x256xf32> to vector<1x256xf32>
    %43 = vector.broadcast %42 : vector<1x256xf32> to vector<4x256xf32>
    %44 = arith.mulf %41, %43 : vector<4x256xf32>
    %45 = vector.extract_strided_slice %2 {offsets = [0, 5], sizes = [4, 1], strides = [1, 1]} : vector<4x9xf32> to vector<4x1xf32>
    %46 = vector.broadcast %45 : vector<4x1xf32> to vector<4x256xf32>
    %47 = arith.mulf %44, %46 : vector<4x256xf32>
    %48 = arith.addf %40, %47 : vector<4x256xf32>
    %c241_i32 = arith.constant 241 : i32
    %49 = tpu.dynamic_rotate %1 by %c241_i32 dim 1 : vector<4x256xf32>, i32 -> vector<4x256xf32>
    %50 = vector.extract_strided_slice %3 {offsets = [6, 0], sizes = [1, 256], strides = [1, 1]} : vector<9x256xf32> to vector<1x256xf32>
    %51 = vector.broadcast %50 : vector<1x256xf32> to vector<4x256xf32>
    %52 = arith.mulf %49, %51 : vector<4x256xf32>
    %53 = vector.extract_strided_slice %2 {offsets = [0, 6], sizes = [4, 1], strides = [1, 1]} : vector<4x9xf32> to vector<4x1xf32>
    %54 = vector.broadcast %53 : vector<4x1xf32> to vector<4x256xf32>
    %55 = arith.mulf %52, %54 : vector<4x256xf32>
    %56 = arith.addf %48, %55 : vector<4x256xf32>
    %c240_i32 = arith.constant 240 : i32
    %57 = tpu.dynamic_rotate %1 by %c240_i32 dim 1 : vector<4x256xf32>, i32 -> vector<4x256xf32>
    %58 = vector.extract_strided_slice %3 {offsets = [7, 0], sizes = [1, 256], strides = [1, 1]} : vector<9x256xf32> to vector<1x256xf32>
    %59 = vector.broadcast %58 : vector<1x256xf32> to vector<4x256xf32>
    %60 = arith.mulf %57, %59 : vector<4x256xf32>
    %61 = vector.extract_strided_slice %2 {offsets = [0, 7], sizes = [4, 1], strides = [1, 1]} : vector<4x9xf32> to vector<4x1xf32>
    %62 = vector.broadcast %61 : vector<4x1xf32> to vector<4x256xf32>
    %63 = arith.mulf %60, %62 : vector<4x256xf32>
    %64 = arith.addf %56, %63 : vector<4x256xf32>
    %c239_i32 = arith.constant 239 : i32
    %65 = tpu.dynamic_rotate %1 by %c239_i32 dim 1 : vector<4x256xf32>, i32 -> vector<4x256xf32>
    %66 = vector.extract_strided_slice %3 {offsets = [8, 0], sizes = [1, 256], strides = [1, 1]} : vector<9x256xf32> to vector<1x256xf32>
    %67 = vector.broadcast %66 : vector<1x256xf32> to vector<4x256xf32>
    %68 = arith.mulf %65, %67 : vector<4x256xf32>
    %69 = vector.extract_strided_slice %2 {offsets = [0, 8], sizes = [4, 1], strides = [1, 1]} : vector<4x9xf32> to vector<4x1xf32>
    %70 = vector.broadcast %69 : vector<4x1xf32> to vector<4x256xf32>
    %71 = arith.mulf %68, %70 : vector<4x256xf32>
    %72 = arith.addf %64, %71 : vector<4x256xf32>
    %c0_6 = arith.constant 0 : index
    %c0_7 = arith.constant 0 : index
    %73 = vector.load %arg4[%c0_6, %c0_7] : memref<8x4xf32, #tpu.memory_space<vmem>>, vector<8x4xf32>
    %cst_8 = arith.constant 0.000000e+00 : f32
    %74 = vector.broadcast %cst_8 : f32 to vector<8x256xf32>
    %75 = vector.extract_strided_slice %73 {offsets = [0, 0], sizes = [8, 1], strides = [1, 1]} : vector<8x4xf32> to vector<8x1xf32>
    %76 = vector.extract_strided_slice %72 {offsets = [0, 0], sizes = [1, 256], strides = [1, 1]} : vector<4x256xf32> to vector<1x256xf32>
    %77 = vector.broadcast %75 : vector<8x1xf32> to vector<8x256xf32>
    %78 = vector.broadcast %76 : vector<1x256xf32> to vector<8x256xf32>
    %79 = arith.mulf %77, %78 : vector<8x256xf32>
    %80 = arith.addf %74, %79 : vector<8x256xf32>
    %81 = vector.extract_strided_slice %73 {offsets = [0, 1], sizes = [8, 1], strides = [1, 1]} : vector<8x4xf32> to vector<8x1xf32>
    %82 = vector.extract_strided_slice %72 {offsets = [1, 0], sizes = [1, 256], strides = [1, 1]} : vector<4x256xf32> to vector<1x256xf32>
    %83 = vector.broadcast %81 : vector<8x1xf32> to vector<8x256xf32>
    %84 = vector.broadcast %82 : vector<1x256xf32> to vector<8x256xf32>
    %85 = arith.mulf %83, %84 : vector<8x256xf32>
    %86 = arith.addf %80, %85 : vector<8x256xf32>
    %87 = vector.extract_strided_slice %73 {offsets = [0, 2], sizes = [8, 1], strides = [1, 1]} : vector<8x4xf32> to vector<8x1xf32>
    %88 = vector.extract_strided_slice %72 {offsets = [2, 0], sizes = [1, 256], strides = [1, 1]} : vector<4x256xf32> to vector<1x256xf32>
    %89 = vector.broadcast %87 : vector<8x1xf32> to vector<8x256xf32>
    %90 = vector.broadcast %88 : vector<1x256xf32> to vector<8x256xf32>
    %91 = arith.mulf %89, %90 : vector<8x256xf32>
    %92 = arith.addf %86, %91 : vector<8x256xf32>
    %93 = vector.extract_strided_slice %73 {offsets = [0, 3], sizes = [8, 1], strides = [1, 1]} : vector<8x4xf32> to vector<8x1xf32>
    %94 = vector.extract_strided_slice %72 {offsets = [3, 0], sizes = [1, 256], strides = [1, 1]} : vector<4x256xf32> to vector<1x256xf32>
    %95 = vector.broadcast %93 : vector<8x1xf32> to vector<8x256xf32>
    %96 = vector.broadcast %94 : vector<1x256xf32> to vector<8x256xf32>
    %97 = arith.mulf %95, %96 : vector<8x256xf32>
    %98 = arith.addf %92, %97 : vector<8x256xf32>
    %c0_9 = arith.constant 0 : index
    %c0_10 = arith.constant 0 : index
    %99 = vector.load %arg5[%c0_9, %c0_10] : memref<8x1xf32, #tpu.memory_space<vmem>>, vector<8x1xf32>
    %100 = vector.broadcast %99 : vector<8x1xf32> to vector<8x256xf32>
    %101 = arith.addf %98, %100 : vector<8x256xf32>
    %c0_11 = arith.constant 0 : index
    %c0_12 = arith.constant 0 : index
    %c0_13 = arith.constant 0 : index
    %102 = vector.load %arg6[%c0_11, %c0_12, %c0_13] : memref<1x8x256xf32, #tpu.memory_space<vmem>>, vector<1x8x256xf32>
    %103 = vector.shape_cast %102 : vector<1x8x256xf32> to vector<8x256xf32>
    %104 = vector.shape_cast %101 : vector<8x256xf32> to vector<1x8x256xf32>
    tpu.vector_store %arg6[%c0_11, %c0_12, %c0_13], %104 {strides = array<i32>} : memref<1x8x256xf32, #tpu.memory_space<vmem>>, vector<1x8x256xf32>,
    return
  }
  func.func @transform_0(%arg0: i32) -> (i32, i32, i32) {
    %c0_i32 = arith.constant 0 : i32
    %c0_i32_0 = arith.constant 0 : i32
    %c0_i32_1 = arith.constant 0 : i32
    return %arg0, %c0_i32, %c0_i32_0 : i32, i32, i32
  }
  func.func @transform_1(%arg0: i32) -> (i32, i32) {
    %c0_i32 = arith.constant 0 : i32
    %c0_i32_0 = arith.constant 0 : i32
    %c0_i32_1 = arith.constant 0 : i32
    return %c0_i32, %c0_i32_0 : i32, i32
  }
  func.func @transform_2(%arg0: i32) -> (i32, i32) {
    %c0_i32 = arith.constant 0 : i32
    %c0_i32_0 = arith.constant 0 : i32
    %c0_i32_1 = arith.constant 0 : i32
    return %c0_i32, %c0_i32_0 : i32, i32
  }
  func.func @transform_3(%arg0: i32) -> (i32, i32) {
    %c0_i32 = arith.constant 0 : i32
    %c0_i32_0 = arith.constant 0 : i32
    %c0_i32_1 = arith.constant 0 : i32
    return %c0_i32, %c0_i32_0 : i32, i32
  }
  func.func @transform_4(%arg0: i32) -> (i32, i32) {
    %c0_i32 = arith.constant 0 : i32
    %c0_i32_0 = arith.constant 0 : i32
    %c0_i32_1 = arith.constant 0 : i32
    return %c0_i32, %c0_i32_0 : i32, i32
  }
  func.func @transform_5(%arg0: i32) -> (i32, i32, i32) {
    %c0_i32 = arith.constant 0 : i32
    %c0_i32_0 = arith.constant 0 : i32
    %c0_i32_1 = arith.constant 0 : i32
    return %arg0, %c0_i32, %c0_i32_0 : i32, i32, i32
  }
}

</mosaic_0001>

<llo_original>
// kernel: dscb_forward.1
$region0: #{dscb_forward.1}
  #allocation0 [shape = 'u32[]', space=smem, size = 0x4, offset = 0x4, fixed_abs, tag = 'smem constant byte address 0x4 - core index']
  #allocation1 [shape = 'u32[144,128]{1,0:T(1,128)}', space=vmem, size = 0x12000, scoped, tag = 'internal scratch']
  %s0 = inlined_call_operand.vmem [shape: f32[2,4,256], index: 0, kind: input, shape index: {}]
  %s1 = inlined_call_operand.vmem [shape: f32[9,256], index: 1, kind: input, shape index: {}]
  %s2 = inlined_call_operand.vmem [shape: f32[4,9], index: 2, kind: input, shape index: {}]
  %s3 = inlined_call_operand.vmem [shape: f32[8,4], index: 3, kind: input, shape index: {}]
  %s4 = inlined_call_operand.vmem [shape: f32[8,1], index: 4, kind: input, shape index: {}]
  %s5 = inlined_call_operand.vmem [shape: f32[2,8,256], index: 5, kind: output, shape index: {}]
  %s6 = sld [smem:[#allocation0]]
  $region53: #{dscb_forward.1} parent=0
    _
  %s8 = ssub.s32 1, %s6
  %s9 = scalar_select 0, %s8, %s6
  loop: start=0, step=1, limit=4
  $region2: #{dscb_forward.1} parent=0 // loop_pre_header
    _
  $region3: #{dscb_forward.1} parent=0 // loop_header
    %s11 = sphi 0, %s15
    %p12 = scmp.ge.s32.totalorder %s11, 4
    %s21 = sphi 0, %s23
    %s24 = sphi 0, %s21
    %s25 = sphi 0, %s24
    %s41 = sphi 0, %s25
    %s45 = sphi 0, %s45
    %s47 = sphi 0, %s45
    %s48 = sphi 0, %s47
    %s62 = sphi 0, %s48
    %s66 = sphi 0, %s66
    %s68 = sphi 0, %s66
    %s69 = sphi 0, %s68
    %s83 = sphi 0, %s69
    %s87 = sphi 0, %s87
    %s89 = sphi 0, %s87
    %s90 = sphi 0, %s89
    %s104 = sphi 0, %s90
    %s108 = sphi 0, %s108
    %s110 = sphi 0, %s108
    %s111 = sphi 0, %s110
    %s125 = sphi 0, %s111
    %s131 = sphi 0, %s133
    %s134 = sphi 0, %s131
    %s135 = sphi 0, %s134
    %s151 = sphi 0, %s135
  $region4: #{dscb_forward.1} parent=0 // loop_header_branch
    %14 = sbr.rel (%p12) target = $region8
  $region5: #{dscb_forward.1} parent=0 // loop_body
    %s16 = ssub.s32 %s11, 1
    %s17 = ssub.s32 %s11, 2
    %s18 = sadd.s32 %s11, 1
    %s19 = ssub.s32 %s11, %s18
    %p20 = scmp.eq.s32.totalorder %s19, 0
    %s22 = sadd.s32 %s21, 1
    %s23 = scalar_select %p20, %s21, %s22
    %p26 = pneg %p20
    %p27 = scmp.eq.s32.totalorder %s11, 1
    %p28 = por %p26, %p27
    %p29 = scmp.ne.s32.totalorder %s21, %s24
    %p30 = scmp.eq.s32.totalorder %s11, 0
    %p31 = por %p29, %p30
    %p32 = scmp.ne.s32.totalorder %s21, %s24
    %p33 = scmp.eq.s32.totalorder %s16, 1
    %p34 = por %p32, %p33
    %p35 = scmp.ne.s32.totalorder %s24, %s25
    %p36 = scmp.eq.s32.totalorder %s16, 0
    %p37 = por %p35, %p36
    %p38 = scmp.ne.s32.totalorder %s24, %s25
    %p39 = scmp.eq.s32.totalorder %s17, 1
    %p40 = por %p38, %p39
    %p42 = scmp.ne.s32.totalorder %s25, %s41
    %p43 = scmp.eq.s32.totalorder %s17, 0
    %p44 = por %p42, %p43
    %s46 = sadd.s32 %s45, 1
    %p49 = scmp.eq.s32.totalorder %s11, 1
    %p50 = scmp.ne.s32.totalorder %s45, %s47
    %p51 = scmp.eq.s32.totalorder %s11, 0
    %p52 = por %p50, %p51
    %p53 = scmp.ne.s32.totalorder %s45, %s47
    %p54 = scmp.eq.s32.totalorder %s16, 1
    %p55 = por %p53, %p54
    %p56 = scmp.ne.s32.totalorder %s47, %s48
    %p57 = scmp.eq.s32.totalorder %s16, 0
    %p58 = por %p56, %p57
    %p59 = scmp.ne.s32.totalorder %s47, %s48
    %p60 = scmp.eq.s32.totalorder %s17, 1
    %p61 = por %p59, %p60
    %p63 = scmp.ne.s32.totalorder %s48, %s62
    %p64 = scmp.eq.s32.totalorder %s17, 0
    %p65 = por %p63, %p64
    %s67 = sadd.s32 %s66, 1
    %p70 = scmp.eq.s32.totalorder %s11, 1
    %p71 = scmp.ne.s32.totalorder %s66, %s68
    %p72 = scmp.eq.s32.totalorder %s11, 0
    %p73 = por %p71, %p72
    %p74 = scmp.ne.s32.totalorder %s66, %s68
    %p75 = scmp.eq.s32.totalorder %s16, 1
    %p76 = por %p74, %p75
    %p77 = scmp.ne.s32.totalorder %s68, %s69
    %p78 = scmp.eq.s32.totalorder %s16, 0
    %p79 = por %p77, %p78
    %p80 = scmp.ne.s32.totalorder %s68, %s69
    %p81 = scmp.eq.s32.totalorder %s17, 1
    %p82 = por %p80, %p81
    %p84 = scmp.ne.s32.totalorder %s69, %s83
    %p85 = scmp.eq.s32.totalorder %s17, 0
    %p86 = por %p84, %p85
    %s88 = sadd.s32 %s87, 1
    %p91 = scmp.eq.s32.totalorder %s11, 1
    %p92 = scmp.ne.s32.totalorder %s87, %s89
    %p93 = scmp.eq.s32.totalorder %s11, 0
    %p94 = por %p92, %p93
    %p95 = scmp.ne.s32.totalorder %s87, %s89
    %p96 = scmp.eq.s32.totalorder %s16, 1
    %p97 = por %p95, %p96
    %p98 = scmp.ne.s32.totalorder %s89, %s90
    %p99 = scmp.eq.s32.totalorder %s16, 0
    %p100 = por %p98, %p99
    %p101 = scmp.ne.s32.totalorder %s89, %s90
    %p102 = scmp.eq.s32.totalorder %s17, 1
    %p103 = por %p101, %p102
    %p105 = scmp.ne.s32.totalorder %s90, %s104
    %p106 = scmp.eq.s32.totalorder %s17, 0
    %p107 = por %p105, %p106
    %s109 = sadd.s32 %s108, 1
    %p112 = scmp.eq.s32.totalorder %s11, 1
    %p113 = scmp.ne.s32.totalorder %s108, %s110
    %p114 = scmp.eq.s32.totalorder %s11, 0
    %p115 = por %p113, %p114
    %p116 = scmp.ne.s32.totalorder %s108, %s110
    %p117 = scmp.eq.s32.totalorder %s16, 1
    %p118 = por %p116, %p117
    %p119 = scmp.ne.s32.totalorder %s110, %s111
    %p120 = scmp.eq.s32.totalorder %s16, 0
    %p121 = por %p119, %p120
    %p122 = scmp.ne.s32.totalorder %s110, %s111
    %p123 = scmp.eq.s32.totalorder %s17, 1
    %p124 = por %p122, %p123
    %p126 = scmp.ne.s32.totalorder %s111, %s125
    %p127 = scmp.eq.s32.totalorder %s17, 0
    %p128 = por %p126, %p127
    %s129 = ssub.s32 %s11, %s18
    %p130 = scmp.eq.s32.totalorder %s129, 0
    %s132 = sadd.s32 %s131, 1
    %s133 = scalar_select %p130, %s131, %s132
    %p136 = pneg %p130
    %p137 = scmp.eq.s32.totalorder %s11, 1
    %p138 = por %p136, %p137
    %p139 = scmp.ne.s32.totalorder %s131, %s134
    %p140 = scmp.eq.s32.totalorder %s11, 0
    %p141 = por %p139, %p140
    %p142 = scmp.ne.s32.totalorder %s131, %s134
    %p143 = scmp.eq.s32.totalorder %s16, 1
    %p144 = por %p142, %p143
    %p145 = scmp.ne.s32.totalorder %s134, %s135
    %p146 = scmp.eq.s32.totalorder %s16, 0
    %p147 = por %p145, %p146
    %p148 = scmp.ne.s32.totalorder %s134, %s135
    %p149 = scmp.eq.s32.totalorder %s17, 1
    %p150 = por %p148, %p149
    %p152 = scmp.ne.s32.totalorder %s135, %s151
    %p153 = scmp.eq.s32.totalorder %s17, 0
    %p154 = por %p152, %p153
    %p155 = scmp.le.s32.totalorder 1, %s11
    %p156 = scmp.lt.s32.totalorder %s11, 3
    %p157 = pnand %p155, %p156
    %p158 = pneg %p157
    // Predicated region
    $region9: #{dscb_forward.1} parent=5 // pred_check
      _
    $region10: #{dscb_forward.1} parent=5 // pred_check_branch
      %160 = sbr.rel (%p157) target = $region12
    $region11: #{dscb_forward.1} parent=5 // pred_region
      %s161 = ssub.s32 %s11, 1
      // Predicated region
      $region13: #{dscb_forward.1} parent=11 // pred_check
        %p162 = pneg %p58
      $region14: #{dscb_forward.1} parent=11 // pred_check_branch
        %164 = sbr.rel (%p162) target = $region16
      $region15: #{dscb_forward.1} parent=11 // pred_region
        _
      $region16: #{dscb_forward.1} parent=11 // pred_fallthru
        _
      // Predicated region
      $region17: #{dscb_forward.1} parent=11 // pred_check
        %p165 = pneg %p79
      $region18: #{dscb_forward.1} parent=11 // pred_check_branch
        %167 = sbr.rel (%p165) target = $region20
      $region19: #{dscb_forward.1} parent=11 // pred_region
        _
      $region20: #{dscb_forward.1} parent=11 // pred_fallthru
        _
      // Predicated region
      $region21: #{dscb_forward.1} parent=11 // pred_check
        %p168 = pneg %p100
      $region22: #{dscb_forward.1} parent=11 // pred_check_branch
        %170 = sbr.rel (%p168) target = $region24
      $region23: #{dscb_forward.1} parent=11 // pred_region
        _
      $region24: #{dscb_forward.1} parent=11 // pred_fallthru
        _
      // Predicated region
      $region25: #{dscb_forward.1} parent=11 // pred_check
        %p171 = pneg %p121
      $region26: #{dscb_forward.1} parent=11 // pred_check_branch
        %173 = sbr.rel (%p171) target = $region28
      $region27: #{dscb_forward.1} parent=11 // pred_region
        _
      $region28: #{dscb_forward.1} parent=11 // pred_fallthru
        _
    $region12: #{dscb_forward.1} parent=5 // pred_fallthru
      _
    %p174 = scmp.lt.s32.totalorder %s11, 2
    // Predicated region
    $region29: #{dscb_forward.1} parent=5 // pred_check
      %p175 = pneg %p174
    $region30: #{dscb_forward.1} parent=5 // pred_check_branch
      %177 = sbr.rel (%p175) target = $region32
    $region31: #{dscb_forward.1} parent=5 // pred_region
      // Predicated region
      $region33: #{dscb_forward.1} parent=31 // pred_check
        %p178 = pneg %p31
      $region34: #{dscb_forward.1} parent=31 // pred_check_branch
        %180 = sbr.rel (%p178) target = $region36
      $region35: #{dscb_forward.1} parent=31 // pred_region
        %p181 = scmp.lt.s32.totalorder %s11, 1
        %s182 = scalar_select %p181, %s11, 1
        %s183 = smul.addr %s182, 2
        %s184 = smul.addr %s183, 4
        %s185 = scalar_lea.vmem %s0, %s184
      $region36: #{dscb_forward.1} parent=31 // pred_fallthru
        _
    $region32: #{dscb_forward.1} parent=5 // pred_fallthru
      _
    %p186 = scmp.le.s32.totalorder 1, %s11
    %p187 = scmp.lt.s32.totalorder %s11, 3
    %p188 = pnand %p186, %p187
    %p189 = pneg %p188
    // Predicated region
    $region37: #{dscb_forward.1} parent=5 // pred_check
      _
    $region38: #{dscb_forward.1} parent=5 // pred_check_branch
      %191 = sbr.rel (%p188) target = $region40
    $region39: #{dscb_forward.1} parent=5 // pred_region
      %s192 = ssub.s32 %s11, 1
      %p193 = scmp.lt.s32.totalorder %s16, 1
      %s194 = scalar_select %p193, %s16, 1
      %s195 = smul.addr %s194, 2
      %s196 = smul.addr %s195, 4
      %s197 = scalar_lea.vmem %s0, %s196
      %p198 = pneg %p37
      %p199 = pneg %p34
      %p200 = pneg %p58
      %p201 = pneg %p55
      %p202 = pneg %p79
      %p203 = pneg %p76
      %p204 = pneg %p100
      %p205 = pneg %p97
      %p206 = pneg %p121
      %p207 = pneg %p118
      %p208 = pneg %p147
      %p209 = pneg %p144
      %p210 = scmp.lt.s32.totalorder %s16, 1
      %s211 = scalar_select %p210, %s16, 1
      %s212 = smul.addr %s211, 2
      %s213 = smul.addr %s212, 8
      %s214 = scalar_lea.vmem %s5, %s213
      %p215 = scmp.lt.s32.totalorder %s16, 1
      %s216 = scalar_select %p215, %s16, 1
      %s217 = smul.addr %s216, 2
      %s218 = smul.addr %s217, 4
      %s219 = scalar_lea.vmem %s0, %s218
      %p220 = scmp.lt.s32.totalorder %s16, 1
      %s221 = scalar_select %p220, %s16, 1
      %s222 = smul.addr %s221, 2
      %s223 = smul.addr %s222, 8
      %s224 = scalar_lea.vmem %s5, %s223
      %v225 = vld [vmem:[%s219] sm:$0xff]
      %v226 = vld [vmem:[%s2] sm:$0xf]
      %v227 = vld [vmem:[%s1] sm:$0xff]
      %v228 = vld [vmem:[%s1 + $0x8] sm:$0xff]
      %v229 = vld [vmem:[%s1 + $0x10] sm:$0x1]
      %v230 = vld [vmem:[%s1 + $0x18] sm:$0x1]
      %v232 = vcombine.high %v225, %v225
      %234 = vrot.lane.b32.xlu0 %v225, 17
      %v235 = vpop.permute.xlu0 %234
      %236 = vrot.lane.b32.xlu0 %v232, 17
      %v237 = vpop.permute.xlu0 %236
      %v238 = vlaneseq
      %v239 = vand.u32 %v238, 127
      %vm240 = vcmp.lt.s32.totalorder %v239, 17
      %v241 = vsel %vm240, %v235, %v237
      %v242 = vsel %vm240, %v237, %v235
      %v243 = vlaneseq
      %v244 = vshrl.u32 %v243, 7
      %v245 = vsub.s32 0, %v244
      %v246 = vrot.slane %v227, %v245
      %v247 = vlaneseq
      %v248 = vshrl.u32 %v247, 7
      %v249 = vsub.s32 0, %v248
      %v250 = vrot.slane %v228, %v249
      %v251 = vmul.f32 %v242, %v246
      %v252 = vmul.f32 %v241, %v250
      %254 = vset.pattern.permute.xlu0 0
      %255 = vperm.xlu0 %254, %v226
      %v256 = vpop.permute.xlu0 %255
      %v258 = vmul.f32 %v251, %v256
      %v259 = vmul.f32 %v252, %v256
      %v260 = vadd.f32 %v258, 0.0
      %v261 = vadd.f32 %v259, 0.0
      %262 = vrot.lane.b32.xlu0 %v225, 16
      %v263 = vpop.permute.xlu0 %262
      %264 = vrot.lane.b32.xlu0 %v232, 16
      %v265 = vpop.permute.xlu0 %264
      %vm266 = vcmp.lt.s32.totalorder %v239, 16
      %v267 = vsel %vm266, %v263, %v265
      %v268 = vsel %vm266, %v265, %v263
      %v269 = vlaneseq
      %v270 = vshrl.u32 %v269, 7
      %v271 = vsub.s32 1, %v270
      %v272 = vrot.slane %v227, %v271
      %v273 = vlaneseq
      %v274 = vshrl.u32 %v273, 7
      %v275 = vsub.s32 1, %v274
      %v276 = vrot.slane %v228, %v275
      %v277 = vmul.f32 %v268, %v272
      %v278 = vmul.f32 %v267, %v276
      %279 = vset.pattern.permute.xlu0 1
      %280 = vperm.xlu0 %279, %v226
      %v281 = vpop.permute.xlu0 %280
      %v283 = vmul.f32 %v277, %v281
      %v284 = vmul.f32 %v278, %v281
      %v285 = vadd.f32 %v260, %v283
      %v286 = vadd.f32 %v261, %v284
      %287 = vrot.lane.b32.xlu0 %v225, 15
      %v288 = vpop.permute.xlu0 %287
      %289 = vrot.lane.b32.xlu0 %v232, 15
      %v290 = vpop.permute.xlu0 %289
      %vm291 = vcmp.lt.s32.totalorder %v239, 15
      %v292 = vsel %vm291, %v288, %v290
      %v293 = vsel %vm291, %v290, %v288
      %v294 = vlaneseq
      %v295 = vshrl.u32 %v294, 7
      %v296 = vsub.s32 2, %v295
      %v297 = vrot.slane %v227, %v296
      %v298 = vlaneseq
      %v299 = vshrl.u32 %v298, 7
      %v300 = vsub.s32 2, %v299
      %v301 = vrot.slane %v228, %v300
      %v302 = vmul.f32 %v293, %v297
      %v303 = vmul.f32 %v292, %v301
      %304 = vset.pattern.permute.xlu0 2
      %305 = vperm.xlu0 %304, %v226
      %v306 = vpop.permute.xlu0 %305
      %v308 = vmul.f32 %v302, %v306
      %v309 = vmul.f32 %v303, %v306
      %v310 = vadd.f32 %v285, %v308
      %v311 = vadd.f32 %v286, %v309
      %312 = vrot.lane.b32.xlu0 %v225, 1
      %v313 = vpop.permute.xlu0 %312
      %314 = vrot.lane.b32.xlu0 %v232, 1
      %v315 = vpop.permute.xlu0 %314
      %vm316 = vcmp.lt.s32.totalorder %v239, 1
      %v317 = vsel %vm316, %v313, %v315
      %v318 = vsel %vm316, %v315, %v313
      %v319 = vlaneseq
      %v320 = vshrl.u32 %v319, 7
      %v321 = vsub.s32 3, %v320
      %v322 = vrot.slane %v227, %v321
      %v323 = vlaneseq
      %v324 = vshrl.u32 %v323, 7
      %v325 = vsub.s32 3, %v324
      %v326 = vrot.slane %v228, %v325
      %v327 = vmul.f32 %v318, %v322
      %v328 = vmul.f32 %v317, %v326
      %329 = vset.pattern.permute.xlu0 3
      %330 = vperm.xlu0 %329, %v226
      %v331 = vpop.permute.xlu0 %330
      %v333 = vmul.f32 %v327, %v331
      %v334 = vmul.f32 %v328, %v331
      %v335 = vadd.f32 %v310, %v333
      %v336 = vadd.f32 %v311, %v334
      %337 = vset.pattern.permute.xlu0 4
      %338 = vperm.xlu0 %337, %v226
      %v339 = vpop.permute.xlu0 %338
      %v341 = vunpack.c.l.s4 839922192
      %v342 = vunpack.c.0.s8 %v341
      %v343 = vlaneseq
      %v344 = vshrl.u32 %v343, 7
      %v345 = vsub.s32 %v342, %v344
      %v346 = vrot.slane %v339, %v345
      %v348 = vmul.f32 %v225, %v346
      %v350 = vcombine.high %v348, %v348
      %v352 = vadd.f32 %v335, %v348
      %v353 = vadd.f32 %v336, %v350
      %354 = vrot.lane.b32.xlu0 %v225, 127
      %v355 = vpop.permute.xlu0 %354
      %356 = vrot.lane.b32.xlu0 %v232, 127
      %v357 = vpop.permute.xlu0 %356
      %vm358 = vcmp.lt.s32.totalorder %v239, 127
      %v359 = vsel %vm358, %v355, %v357
      %v360 = vsel %vm358, %v357, %v355
      %v361 = vlaneseq
      %v362 = vshrl.u32 %v361, 7
      %v363 = vsub.s32 5, %v362
      %v364 = vrot.slane %v227, %v363
      %v365 = vlaneseq
      %v366 = vshrl.u32 %v365, 7
      %v367 = vsub.s32 5, %v366
      %v368 = vrot.slane %v228, %v367
      %v369 = vmul.f32 %v359, %v364
      %v370 = vmul.f32 %v360, %v368
      %371 = vset.pattern.permute.xlu0 5
      %372 = vperm.xlu0 %371, %v226
      %v373 = vpop.permute.xlu0 %372
      %v375 = vmul.f32 %v369, %v373
      %v376 = vmul.f32 %v370, %v373
      %v377 = vadd.f32 %v352, %v375
      %v378 = vadd.f32 %v353, %v376
      %379 = vrot.lane.b32.xlu0 %v225, 113
      %v380 = vpop.permute.xlu0 %379
      %381 = vrot.lane.b32.xlu0 %v232, 113
      %v382 = vpop.permute.xlu0 %381
      %vm383 = vcmp.lt.s32.totalorder %v239, 113
      %v384 = vsel %vm383, %v380, %v382
      %v385 = vsel %vm383, %v382, %v380
      %v386 = vlaneseq
      %v387 = vshrl.u32 %v386, 7
      %v388 = vsub.s32 6, %v387
      %v389 = vrot.slane %v227, %v388
      %v390 = vlaneseq
      %v391 = vshrl.u32 %v390, 7
      %v392 = vsub.s32 6, %v391
      %v393 = vrot.slane %v228, %v392
      %v394 = vmul.f32 %v384, %v389
      %v395 = vmul.f32 %v385, %v393
      %396 = vset.pattern.permute.xlu0 6
      %397 = vperm.xlu0 %396, %v226
      %v398 = vpop.permute.xlu0 %397
      %v400 = vmul.f32 %v394, %v398
      %v401 = vmul.f32 %v395, %v398
      %v402 = vadd.f32 %v377, %v400
      %v403 = vadd.f32 %v378, %v401
      %404 = vrot.lane.b32.xlu0 %v225, 112
      %v405 = vpop.permute.xlu0 %404
      %406 = vrot.lane.b32.xlu0 %v232, 112
      %v407 = vpop.permute.xlu0 %406
      %vm408 = vcmp.lt.s32.totalorder %v239, 112
      %v409 = vsel %vm408, %v405, %v407
      %v410 = vsel %vm408, %v407, %v405
      %v411 = vlaneseq
      %v412 = vshrl.u32 %v411, 7
      %v413 = vsub.s32 7, %v412
      %v414 = vrot.slane %v227, %v413
      %v415 = vlaneseq
      %v416 = vshrl.u32 %v415, 7
      %v417 = vsub.s32 7, %v416
      %v418 = vrot.slane %v228, %v417
      %v419 = vmul.f32 %v409, %v414
      %v420 = vmul.f32 %v410, %v418
      %421 = vset.pattern.permute.xlu0 7
      %422 = vperm.xlu0 %421, %v226
      %v423 = vpop.permute.xlu0 %422
      %v425 = vmul.f32 %v419, %v423
      %v426 = vmul.f32 %v420, %v423
      %v427 = vadd.f32 %v402, %v425
      %v428 = vadd.f32 %v403, %v426
      %429 = vrot.lane.b32.xlu0 %v225, 111
      %v430 = vpop.permute.xlu0 %429
      %431 = vrot.lane.b32.xlu0 %v232, 111
      %v432 = vpop.permute.xlu0 %431
      %vm433 = vcmp.lt.s32.totalorder %v239, 111
      %v434 = vsel %vm433, %v430, %v432
      %v435 = vsel %vm433, %v432, %v430
      %v436 = vlaneseq
      %v437 = vshrl.u32 %v436, 7
      %v438 = vsub.s32 0, %v437
      %v439 = vrot.slane %v229, %v438
      %v440 = vlaneseq
      %v441 = vshrl.u32 %v440, 7
      %v442 = vsub.s32 0, %v441
      %v443 = vrot.slane %v230, %v442
      %v444 = vmul.f32 %v434, %v439
      %v445 = vmul.f32 %v435, %v443
      %446 = vset.pattern.permute.xlu0 8
      %447 = vperm.xlu0 %446, %v226
      %v448 = vpop.permute.xlu0 %447
      %v450 = vmul.f32 %v444, %v448
      %v451 = vmul.f32 %v445, %v448
      %v452 = vadd.f32 %v427, %v450
      %v453 = vadd.f32 %v428, %v451
      %v454 = vld [vmem:[%s3] sm:$0xff]
      %456 = vset.pattern.permute.xlu0 0
      %457 = vperm.xlu0 %456, %v454
      %v458 = vpop.permute.xlu0 %457
      %v460 = vlaneseq
      %v461 = vshrl.u32 %v460, 7
      %v462 = vsub.s32 0, %v461
      %v463 = vrot.slane %v452, %v462
      %v464 = vlaneseq
      %v465 = vshrl.u32 %v464, 7
      %v466 = vsub.s32 0, %v465
      %v467 = vrot.slane %v453, %v466
      %v468 = vmul.f32 %v458, %v463
      %v469 = vmul.f32 %v458, %v467
      %v470 = vadd.f32 %v468, 0.0
      %v471 = vadd.f32 %v469, 0.0
      %472 = vset.pattern.permute.xlu0 1
      %473 = vperm.xlu0 %472, %v454
      %v474 = vpop.permute.xlu0 %473
      %v476 = vlaneseq
      %v477 = vshrl.u32 %v476, 7
      %v478 = vsub.s32 1, %v477
      %v479 = vrot.slane %v452, %v478
      %v480 = vlaneseq
      %v481 = vshrl.u32 %v480, 7
      %v482 = vsub.s32 1, %v481
      %v483 = vrot.slane %v453, %v482
      %v484 = vmul.f32 %v474, %v479
      %v485 = vmul.f32 %v474, %v483
      %v486 = vadd.f32 %v470, %v484
      %v487 = vadd.f32 %v471, %v485
      %488 = vset.pattern.permute.xlu0 2
      %489 = vperm.xlu0 %488, %v454
      %v490 = vpop.permute.xlu0 %489
      %v492 = vlaneseq
      %v493 = vshrl.u32 %v492, 7
      %v494 = vsub.s32 2, %v493
      %v495 = vrot.slane %v452, %v494
      %v496 = vlaneseq
      %v497 = vshrl.u32 %v496, 7
      %v498 = vsub.s32 2, %v497
      %v499 = vrot.slane %v453, %v498
      %v500 = vmul.f32 %v490, %v495
      %v501 = vmul.f32 %v490, %v499
      %v502 = vadd.f32 %v486, %v500
      %v503 = vadd.f32 %v487, %v501
      %504 = vset.pattern.permute.xlu0 3
      %505 = vperm.xlu0 %504, %v454
      %v506 = vpop.permute.xlu0 %505
      %v508 = vlaneseq
      %v509 = vshrl.u32 %v508, 7
      %v510 = vsub.s32 3, %v509
      %v511 = vrot.slane %v452, %v510
      %v512 = vlaneseq
      %v513 = vshrl.u32 %v512, 7
      %v514 = vsub.s32 3, %v513
      %v515 = vrot.slane %v453, %v514
      %v516 = vmul.f32 %v506, %v511
      %v517 = vmul.f32 %v506, %v515
      %v518 = vadd.f32 %v502, %v516
      %v519 = vadd.f32 %v503, %v517
      %v520 = vld [vmem:[%s4] sm:$0xff]
      %522 = vset.pattern.permute.xlu0 0
      %523 = vperm.xlu0 %522, %v520
      %v524 = vpop.permute.xlu0 %523
      %v526 = vadd.f32 %v518, %v524
      %v527 = vadd.f32 %v519, %v524
      %528 = vst [vmem:[%s224] sm:$0xff] %v526
      %529 = vst [vmem:[%s224 + $0x8] sm:$0xff] %v527
      %p530 = scmp.lt.s32.totalorder %s16, 1
      %s531 = scalar_select %p530, %s16, 1
      %s532 = smul.addr %s531, 2
      %s533 = smul.addr %s532, 8
      %s534 = scalar_lea.vmem %s5, %s533
      // Predicated region
      $region41: #{dscb_forward.1} parent=39 // pred_check
        %p535 = pneg %p144
      $region42: #{dscb_forward.1} parent=39 // pred_check_branch
        %537 = sbr.rel (%p535) target = $region44
      $region43: #{dscb_forward.1} parent=39 // pred_region
        _
      $region44: #{dscb_forward.1} parent=39 // pred_fallthru
        _
    $region40: #{dscb_forward.1} parent=5 // pred_fallthru
      _
    %p538 = scmp.le.s32.totalorder 2, %s11
    // Predicated region
    $region45: #{dscb_forward.1} parent=5 // pred_check
      %p539 = pneg %p538
    $region46: #{dscb_forward.1} parent=5 // pred_check_branch
      %541 = sbr.rel (%p539) target = $region48
    $region47: #{dscb_forward.1} parent=5 // pred_region
      %s542 = ssub.s32 %s11, 2
      // Predicated region
      $region49: #{dscb_forward.1} parent=47 // pred_check
        %p543 = pneg %p150
      $region50: #{dscb_forward.1} parent=47 // pred_check_branch
        %545 = sbr.rel (%p543) target = $region52
      $region51: #{dscb_forward.1} parent=47 // pred_region
        %p546 = scmp.lt.s32.totalorder %s17, 1
        %s547 = scalar_select %p546, %s17, 1
        %s548 = smul.addr %s547, 2
        %s549 = smul.addr %s548, 8
        %s550 = scalar_lea.vmem %s5, %s549
      $region52: #{dscb_forward.1} parent=47 // pred_fallthru
        _
    $region48: #{dscb_forward.1} parent=5 // pred_fallthru
      _
  $region6: #{dscb_forward.1} parent=0 // loop_footer
    %s15 = sadd.s32 1, %s11
  $region7: #{dscb_forward.1} parent=0 // loop_footer_branch
    %10 = sbr.rel target = $region3
  $region8: #{dscb_forward.1} parent=0 // loop_exit
    _

</llo_original>
